<compile_context>
chip_gen: v7x
topology: tpu7x:2x2x1
jax: 0.10.0
libtpu: 0.0.40
codegen_flags: <defaults>
</compile_context>

<pallas_src>
import jax
import jax.numpy as jnp
from jax.experimental import pallas as pl
from jax.experimental.pallas import tpu as pltpu

EULER = 0.5772156649015329


def _softplus(x):
    # numerically stable log(1 + exp(x)) == -log(sigmoid(-x))
    return jnp.maximum(x, 0.0) + jnp.log1p(jnp.exp(-jnp.abs(x)))


def _sigmoid(x):
    # tanh form: exactly sigmoid(x), a single EUP op (no exp + reciprocal).
    return 0.5 * jnp.tanh(0.5 * x) + 0.5


def _logaddexp(a, b):
    # stable log(exp(a) + exp(b))
    return jnp.maximum(a, b) + jnp.log1p(jnp.exp(-jnp.abs(a - b)))


def _make_box_kernel(*, tau, beta, gd, H, with_aux):
    inv_tau = 1.0 / tau
    inv_beta = 1.0 / beta
    two_euler = 2.0 * EULER

    def kernel(u_emb_ref, i_emb_ref,
               w_user_ref, b_user_ref,     # [D, 3H] / [1, 3H]  (centers|offsets|mask)
               w_item_ref, b_item_ref,     # [D, 2H] / [1, 2H]  (centers|offsets)
               w_at_ref, b_at_ref,         # [D, H]  / [1, H]
               logit_delta_ref,            # [tb, H] precomputed logit(U(0,1))
               score_ref, *aux_refs):

        def stash(slot, val):
            # direct sliced store into the aux slab; retires `val` early.
            if with_aux:
                aux_refs[0][:, slot * H:(slot + 1) * H] = val.astype(aux_refs[0].dtype)

        ue = u_emb_ref[...]
        ie = i_emb_ref[...]

        # Two wide fused matmuls (user: centers|offsets|mask, item: centers|offsets).
        uproj = (jnp.dot(ue, w_user_ref[...], preferred_element_type=jnp.float32)
                 + b_user_ref[...])
        iproj = (jnp.dot(ie, w_item_ref[...], preferred_element_type=jnp.float32)
                 + b_item_ref[...])

        user_centers = uproj[:, 0:H]
        user_offsets = _softplus(uproj[:, H:2 * H])
        mask_weight = uproj[:, 2 * H:3 * H]
        item_centers = iproj[:, 0:H]
        item_offsets = _softplus(iproj[:, H:2 * H])
        stash(8, user_centers)
        stash(9, item_centers)
        stash(0, user_offsets)
        stash(1, item_offsets)

        user_uppers = _sigmoid(user_centers + user_offsets)
        user_lowers = _sigmoid(user_centers - user_offsets)
        item_uppers = _sigmoid(item_centers + item_offsets)
        item_lowers = _sigmoid(item_centers - item_offsets)
        stash(4, user_lowers)
        stash(5, user_uppers)
        stash(6, item_lowers)
        stash(7, item_uppers)

        if gd:
            # Gumbel-intersection branch in stable logaddexp form.
            uppers = beta * _logaddexp(user_uppers * inv_beta, item_uppers * inv_beta)
            lowers = -beta * _logaddexp(-user_lowers * inv_beta, -item_lowers * inv_beta)
            interactions = beta * _softplus((uppers - lowers) * inv_beta - two_euler)
        else:
            interactions = (jnp.minimum(user_uppers, item_uppers)
                            - jnp.maximum(user_lowers, item_lowers))

        # -log(sigmoid(-x)) == softplus(x)
        interactions = _softplus(interactions)

        # attention branch (requires D == H, asserted in the wrapper);
        # LHS cast to the weight dtype so bf16 x bf16 hits full MXU throughput.
        attn_lhs = jnp.tanh(ue.astype(jnp.float32) * interactions).astype(w_at_ref.dtype)
        attn = (jnp.dot(attn_lhs, w_at_ref[...], preferred_element_type=jnp.float32)
                + b_at_ref[...])
        stash(3, attn)
        interactions = attn * interactions

        # concrete-mask branch; logit(delta) precomputed outside the kernel.
        masks = _sigmoid((logit_delta_ref[...].astype(jnp.float32) + mask_weight) * inv_tau)
        stash(2, masks)
        interactions = interactions * masks

        score_ref[...] = jnp.sum(interactions, axis=1, keepdims=True)

    return kernel


def _pick_batch_tile(B, tb_req, prefer_two_steps=True):
    """Largest multiple-of-8 divisor of B that is <= tb_req (and, when B allows,
    keeps the grid length >= 2 so v7x's two TensorCores both get work).
    Falls back to tb = B (block == full dim, always legal)."""
    cands = [d for d in range(8, B + 1, 8) if B % d == 0]
    if not cands:
        return B
    cap = tb_req
    if prefer_two_steps and B >= 16:
        cap = min(cap, B // 2)
    ok = [d for d in cands if d <= cap]
    if ok:
        return max(ok)
    return min(cands)


def box_model_forward(u_emb, i_emb, params, logit_delta, *, tau, beta, gd,
                      tb=256, return_aux=True, split_aux=True,
                      compute_dtype=None, aux_dtype=jnp.float32):
    """Fused BoxModel score kernel.

    u_emb, i_emb : [B, D] float32 (base model = embedding lookup, done in JAX)
    params       : dict of pre-transposed weights [D, H] and biases [1, H]
    logit_delta  : [B, H] = log(delta) - log(1 - delta), delta ~ U(0,1)
    compute_dtype: e.g. jnp.bfloat16 (works on v5e/v6e/v7x) to halve HBM reads of
                   embeddings / weights / noise; all post-matmul math stays f32.
    aux_dtype    : dtype of the packed aux outputs (bf16 halves the largest HBM
                   write stream if downstream tolerates it).
    """
    B, D = u_emb.shape
    H = params["w_uc"].shape[1]
    assert params["w_uc"].shape[0] == D
    assert D == H, "attn branch requires n_input == n_hidden (ue * interactions)"
    tb = _pick_batch_tile(B, tb)
    grid = B // tb

    f32 = jnp.float32

    # Fuse weights once (cheap, constant-folded under jit):
    #   user side: centers | offsets | mask  -> [D, 3H]
    #   item side: centers | offsets         -> [D, 2H]
    w_user = jnp.concatenate([params["w_uc"], params["w_uo"], params["w_mask"]], axis=1)
    b_user = jnp.concatenate([params["b_uc"], params["b_uo"], params["b_mask"]], axis=1)
    w_item = jnp.concatenate([params["w_ic"], params["w_io"]], axis=1)
    b_item = jnp.concatenate([params["b_ic"], params["b_io"]], axis=1)
    w_attn, b_attn = params["w_attn"], params["b_attn"]

    if compute_dtype is not None:
        u_emb = u_emb.astype(compute_dtype)
        i_emb = i_emb.astype(compute_dtype)
        logit_delta = logit_delta.astype(compute_dtype)
        w_user = w_user.astype(compute_dtype)
        w_item = w_item.astype(compute_dtype)
        w_attn = w_attn.astype(compute_dtype)

    emb_spec = pl.BlockSpec((tb, D), lambda i: (i, 0))
    h_spec = pl.BlockSpec((tb, H), lambda i: (i, 0))

    def rep(shape):  # weights/biases: same block every grid step
        return pl.BlockSpec(shape, lambda i: (0, 0))

    in_specs = [
        emb_spec, emb_spec,
        rep((D, 3 * H)), rep((1, 3 * H)),
        rep((D, 2 * H)), rep((1, 2 * H)),
        rep((D, H)), rep((1, H)),
        h_spec,
    ]

    out_shapes = [jax.ShapeDtypeStruct((B, 1), f32)]
    out_specs = [pl.BlockSpec((tb, 1), lambda i: (i, 0))]
    if return_aux:
        out_shapes.append(jax.ShapeDtypeStruct((B, 10 * H), aux_dtype))
        out_specs.append(pl.BlockSpec((tb, 10 * H), lambda i: (i, 0)))

    kernel = _make_box_kernel(tau=tau, beta=beta, gd=gd, H=H, with_aux=return_aux)

    in_item = 2 if compute_dtype == jnp.bfloat16 else 4
    aux_item = jnp.dtype(aux_dtype).itemsize

    # Rough VMEM budget: double-buffered input tiles, default double-buffered
    # weights, double-buffered outputs, plus live f32 temporaries in the body.
    vmem_est = (
        2 * (2 * tb * D + tb * H) * in_item
        + 2 * (D * 6 * H) * in_item + 2 * (6 * H) * 4
        + 2 * (tb * 4 + (tb * 10 * H * aux_item if return_aux else 0))
        + 24 * tb * H * 4
    )
    vmem_limit = int(min(max(vmem_est * 3 // 2, 16 * 1024 * 1024), 64 * 1024 * 1024))

    bytes_in = in_item * (2 * B * D + 6 * D * H + B * H) + 4 * 6 * H
    bytes_out = 4 * B + (10 * B * H * aux_item if return_aux else 0)
    cost = pl.CostEstimate(
        flops=int(2 * B * D * 6 * H + 40 * B * H),
        transcendentals=int((16 if gd else 13) * B * H),
        bytes_accessed=int(bytes_in + bytes_out),
    )

    outs = pl.pallas_call(
        kernel,
        out_shape=tuple(out_shapes),
        grid_spec=pltpu.PrefetchScalarGridSpec(
            num_scalar_prefetch=0,
            grid=(grid,),
            in_specs=in_specs,
            out_specs=tuple(out_specs),
        ),
        compiler_params=pltpu.CompilerParams(
            dimension_semantics=("parallel",),
            vmem_limit_bytes=vmem_limit,
        ),
        cost_estimate=cost,
    )(u_emb, i_emb, w_user, b_user, w_item, b_item, w_attn, b_attn, logit_delta)

    score = outs[0].reshape(B)
    if not return_aux:
        return (score,)
    aux3 = outs[1].reshape(B, 10, H)
    if not split_aux:
        # slab layout (axis 1): user_offsets, item_offsets, masks, attn,
        #   user_lowers, user_uppers, item_lowers, item_uppers,
        #   user_centers, item_centers
        return (score, aux3)
    pieces = tuple(aux3[:, k, :] for k in range(10))
    return (score,) + pieces


# -------------------- pure-JAX reference (for correctness check) --------------------
def box_model_reference(u_emb, i_emb, params, delta, *, tau, beta, gd):
    def linear(x, w, b):
        return x @ w + b

    uc = linear(u_emb, params["w_uc"], params["b_uc"])
    uo = jax.nn.softplus(linear(u_emb, params["w_uo"], params["b_uo"]))
    ic = linear(i_emb, params["w_ic"], params["b_ic"])
    io = jax.nn.softplus(linear(i_emb, params["w_io"], params["b_io"]))
    uu = jax.nn.sigmoid(uc + uo)
    ul = jax.nn.sigmoid(uc - uo)
    iu = jax.nn.sigmoid(ic + io)
    il = jax.nn.sigmoid(ic - io)
    if gd:
        uppers = beta * jnp.log(jnp.exp(uu / beta) + jnp.exp(iu / beta))
        lowers = -beta * jnp.log(jnp.exp(-ul / beta) + jnp.exp(-il / beta))
        inter = beta * jnp.log(1.0 + jnp.exp((uppers - lowers) / beta - 2.0 * EULER))
    else:
        inter = jnp.minimum(uu, iu) - jnp.maximum(ul, il)
    inter = -jnp.log(jax.nn.sigmoid(-inter))
    attn = linear(jnp.tanh(u_emb * inter), params["w_attn"], params["b_attn"])
    inter = attn * inter
    mw = linear(u_emb, params["w_mask"], params["b_mask"])
    masks = jax.nn.sigmoid((jnp.log(delta) - jnp.log(1.0 - delta) + mw) / tau)
    inter = inter * masks
    return (jnp.sum(inter, axis=1), uo, io, masks, attn, ul, uu, il, iu, uc, ic)


# -------------------- deterministic parameter init --------------------
def xavier_normal(key, fan_in, fan_out):
    std = (2.0 / (fan_in + fan_out)) ** 0.5
    # PyTorch Linear weight is [out, in]; we store it transposed as [in, out].
    return std * jax.random.normal(key, (fan_in, fan_out), dtype=jnp.float32)


def bias_init(key, fan_in, fan_out):
    bound = 1.0 / (fan_in ** 0.5)
    return jax.random.uniform(key, (1, fan_out), dtype=jnp.float32,
                              minval=-bound, maxval=bound)


if __name__ == "__main__":
    # small synthetic sizes; attn branch requires n_input == n_hidden
    B, D, H = 8, 32, 32
    N_USERS, N_ITEMS = 16, 16
    TAU, BETA = 0.5, 1.0

    root = jax.random.PRNGKey(0)
    keys = jax.random.split(root, 20)

    # base model: plain embedding tables + lookup (glue, stays in JAX)
    user_table = 0.1 * jax.random.normal(keys[0], (N_USERS, D), dtype=jnp.float32)
    item_table = 0.1 * jax.random.normal(keys[1], (N_ITEMS, D), dtype=jnp.float32)
    users = jax.random.randint(keys[2], (B,), 0, N_USERS)
    items = jax.random.randint(keys[3], (B,), 0, N_ITEMS)
    u_emb = user_table[users]
    i_emb = item_table[items]

    params = {
        "w_uc": xavier_normal(keys[4], D, H),  "b_uc": bias_init(keys[5], D, H),
        "w_uo": xavier_normal(keys[6], D, H),  "b_uo": bias_init(keys[7], D, H),
        "w_ic": xavier_normal(keys[8], D, H),  "b_ic": bias_init(keys[9], D, H),
        "w_io": xavier_normal(keys[10], D, H), "b_io": bias_init(keys[11], D, H),
        "w_attn": xavier_normal(keys[12], D, H), "b_attn": bias_init(keys[13], D, H),
        "w_mask": xavier_normal(keys[14], D, H), "b_mask": bias_init(keys[15], D, H),
    }

    # torch.rand_like noise for the concrete mask, precomputed deterministically;
    # logit(delta) is computed here (where the noise is made) so the kernel skips
    # 2 logs/element.
    delta = jax.random.uniform(keys[16], (B, H), dtype=jnp.float32,
                               minval=1e-6, maxval=1.0 - 1e-6)
    logit_delta = jnp.log(delta) - jnp.log1p(-delta)

    # ---- f32, hard intersection (gd=False): check score + all 10 aux outputs ----
    outs = box_model_forward(u_emb, i_emb, params, logit_delta,
                             tau=TAU, beta=BETA, gd=False,
                             return_aux=True, compute_dtype=None)
    outs = jax.block_until_ready(outs)
    refs = box_model_reference(u_emb, i_emb, params, delta,
                               tau=TAU, beta=BETA, gd=False)
    for k, (got, ref) in enumerate(zip(outs, refs)):
        assert jnp.allclose(got, ref, atol=2e-4, rtol=2e-4), (
            f"gd=False output {k} mismatch vs reference")

    # ---- f32, Gumbel intersection (gd=True): stable logaddexp rewrite ----
    outs_gd = box_model_forward(u_emb, i_emb, params, logit_delta,
                                tau=TAU, beta=BETA, gd=True,
                                return_aux=True, compute_dtype=None)
    outs_gd = jax.block_until_ready(outs_gd)
    refs_gd = box_model_reference(u_emb, i_emb, params, delta,
                                  tau=TAU, beta=BETA, gd=True)
    assert jnp.allclose(outs_gd[0], refs_gd[0], atol=2e-4, rtol=2e-4), (
        "gd=True score mismatch vs reference")

    # ---- bf16 compute path: score only, relaxed per-dtype tolerance ----
    outs_bf = box_model_forward(u_emb, i_emb, params, logit_delta,
                                tau=TAU, beta=BETA, gd=False,
                                return_aux=False, compute_dtype=jnp.bfloat16)
    outs_bf = jax.block_until_ready(outs_bf)
    assert jnp.allclose(outs_bf[0], refs[0], atol=1e-1, rtol=1e-1), (
        "bf16 score mismatch vs reference")

    print("KERNEL_OK")
</pallas_src>

<mosaic_0001>
module attributes {stable_mosaic.version = 11 : i64} {
  func.func @kernel(%arg0: i32, %arg1: memref<8x32xf32, #tpu.memory_space<vmem>>, %arg2: memref<8x32xf32, #tpu.memory_space<vmem>>, %arg3: memref<32x96xf32, #tpu.memory_space<vmem>>, %arg4: memref<1x96xf32, #tpu.memory_space<vmem>>, %arg5: memref<32x64xf32, #tpu.memory_space<vmem>>, %arg6: memref<1x64xf32, #tpu.memory_space<vmem>>, %arg7: memref<32x32xf32, #tpu.memory_space<vmem>>, %arg8: memref<1x32xf32, #tpu.memory_space<vmem>>, %arg9: memref<8x32xf32, #tpu.memory_space<vmem>>, %arg10: memref<8x1xf32, #tpu.memory_space<vmem>>, %arg11: memref<8x320xf32, #tpu.memory_space<vmem>>) attributes {dimension_semantics = [#tpu.dimension_semantics<parallel>], iteration_bounds = array<i64: 1>, scalar_prefetch = 0 : i64, scratch_operands = 0 : i64, tpu.core_type = #tpu.core_type<tc>, window_params = [{transform_indices = @transform_0, window_bounds = array<i64: 8, 32>}, {transform_indices = @transform_1, window_bounds = array<i64: 8, 32>}, {pipeline_mode = #tpu.pipeline_mode<synchronous>, transform_indices = @transform_2, window_bounds = array<i64: 32, 96>}, {pipeline_mode = #tpu.pipeline_mode<synchronous>, transform_indices = @transform_3, window_bounds = array<i64: 1, 96>}, {pipeline_mode = #tpu.pipeline_mode<synchronous>, transform_indices = @transform_4, window_bounds = array<i64: 32, 64>}, {pipeline_mode = #tpu.pipeline_mode<synchronous>, transform_indices = @transform_5, window_bounds = array<i64: 1, 64>}, {pipeline_mode = #tpu.pipeline_mode<synchronous>, transform_indices = @transform_6, window_bounds = array<i64: 32, 32>}, {pipeline_mode = #tpu.pipeline_mode<synchronous>, transform_indices = @transform_7, window_bounds = array<i64: 1, 32>}, {transform_indices = @transform_8, window_bounds = array<i64: 8, 32>}, {transform_indices = @transform_9, window_bounds = array<i64: 8, 1>}, {transform_indices = @transform_10, window_bounds = array<i64: 8, 320>}]} {
    %c0 = arith.constant 0 : index
    %c0_0 = arith.constant 0 : index
    %0 = vector.load %arg1[%c0, %c0_0] : memref<8x32xf32, #tpu.memory_space<vmem>>, vector<8x32xf32>
    %c0_1 = arith.constant 0 : index
    %c0_2 = arith.constant 0 : index
    %1 = vector.load %arg2[%c0_1, %c0_2] : memref<8x32xf32, #tpu.memory_space<vmem>>, vector<8x32xf32>
    %c0_3 = arith.constant 0 : index
    %c0_4 = arith.constant 0 : index
    %2 = vector.load %arg3[%c0_3, %c0_4] : memref<32x96xf32, #tpu.memory_space<vmem>>, vector<32x96xf32>
    %cst = arith.constant dense<0.000000e+00> : vector<8x96xf32>
    %3 = tpu.matmul %0, %2, %cst {dimension_numbers = #tpu.dot_dimension_numbers<[1], [0], [0], [1], [0, 0, 1, 1], [], []>} : vector<8x32xf32>, vector<32x96xf32>, vector<8x96xf32> -> vector<8x96xf32>
    %c0_5 = arith.constant 0 : index
    %c0_6 = arith.constant 0 : index
    %4 = vector.load %arg4[%c0_5, %c0_6] : memref<1x96xf32, #tpu.memory_space<vmem>>, vector<1x96xf32>
    %5 = vector.broadcast %4 : vector<1x96xf32> to vector<8x96xf32>
    %6 = arith.addf %3, %5 : vector<8x96xf32>
    %c0_7 = arith.constant 0 : index
    %c0_8 = arith.constant 0 : index
    %7 = vector.load %arg5[%c0_7, %c0_8] : memref<32x64xf32, #tpu.memory_space<vmem>>, vector<32x64xf32>
    %cst_9 = arith.constant dense<0.000000e+00> : vector<8x64xf32>
    %8 = tpu.matmul %1, %7, %cst_9 {dimension_numbers = #tpu.dot_dimension_numbers<[1], [0], [0], [1], [0, 0, 1, 1], [], []>} : vector<8x32xf32>, vector<32x64xf32>, vector<8x64xf32> -> vector<8x64xf32>
    %c0_10 = arith.constant 0 : index
    %c0_11 = arith.constant 0 : index
    %9 = vector.load %arg6[%c0_10, %c0_11] : memref<1x64xf32, #tpu.memory_space<vmem>>, vector<1x64xf32>
    %10 = vector.broadcast %9 : vector<1x64xf32> to vector<8x64xf32>
    %11 = arith.addf %8, %10 : vector<8x64xf32>
    %12 = vector.extract_strided_slice %6 {offsets = [0, 0], sizes = [8, 32], strides = [1, 1]} : vector<8x96xf32> to vector<8x32xf32>
    %13 = vector.extract_strided_slice %6 {offsets = [0, 32], sizes = [8, 32], strides = [1, 1]} : vector<8x96xf32> to vector<8x32xf32>
    %cst_12 = arith.constant 0.000000e+00 : f32
    %14 = vector.broadcast %cst_12 : f32 to vector<8x32xf32>
    %15 = arith.maximumf %13, %14 : vector<8x32xf32>
    %16 = math.absf %13 : vector<8x32xf32>
    %cst_13 = arith.constant 0.000000e+00 : f32
    %17 = vector.broadcast %cst_13 : f32 to vector<8x32xf32>
    %18 = arith.subf %17, %16 : vector<8x32xf32>
    %19 = math.exp %18 : vector<8x32xf32>
    %20 = math.log1p %19 : vector<8x32xf32>
    %21 = arith.addf %15, %20 : vector<8x32xf32>
    %22 = vector.extract_strided_slice %6 {offsets = [0, 64], sizes = [8, 32], strides = [1, 1]} : vector<8x96xf32> to vector<8x32xf32>
    %23 = vector.extract_strided_slice %11 {offsets = [0, 0], sizes = [8, 32], strides = [1, 1]} : vector<8x64xf32> to vector<8x32xf32>
    %24 = vector.extract_strided_slice %11 {offsets = [0, 32], sizes = [8, 32], strides = [1, 1]} : vector<8x64xf32> to vector<8x32xf32>
    %cst_14 = arith.constant 0.000000e+00 : f32
    %25 = vector.broadcast %cst_14 : f32 to vector<8x32xf32>
    %26 = arith.maximumf %24, %25 : vector<8x32xf32>
    %27 = math.absf %24 : vector<8x32xf32>
    %cst_15 = arith.constant 0.000000e+00 : f32
    %28 = vector.broadcast %cst_15 : f32 to vector<8x32xf32>
    %29 = arith.subf %28, %27 : vector<8x32xf32>
    %30 = math.exp %29 : vector<8x32xf32>
    %31 = math.log1p %30 : vector<8x32xf32>
    %32 = arith.addf %26, %31 : vector<8x32xf32>
    %c0_16 = arith.constant 0 : index
    %c256 = arith.constant 256 : index
    %33 = vector.load %arg11[%c0_16, %c256] : memref<8x320xf32, #tpu.memory_space<vmem>>, vector<8x32xf32>
    tpu.vector_store %arg11[%c0_16, %c256], %12 {strides = array<i32>} : memref<8x320xf32, #tpu.memory_space<vmem>>, vector<8x32xf32>,
    %c0_17 = arith.constant 0 : index
    %c288 = arith.constant 288 : index
    %34 = vector.load %arg11[%c0_17, %c288] : memref<8x320xf32, #tpu.memory_space<vmem>>, vector<8x32xf32>
    tpu.vector_store %arg11[%c0_17, %c288], %23 {strides = array<i32>} : memref<8x320xf32, #tpu.memory_space<vmem>>, vector<8x32xf32>,
    %c0_18 = arith.constant 0 : index
    %c0_19 = arith.constant 0 : index
    %35 = vector.load %arg11[%c0_18, %c0_19] : memref<8x320xf32, #tpu.memory_space<vmem>>, vector<8x32xf32>
    tpu.vector_store %arg11[%c0_18, %c0_19], %21 {strides = array<i32>} : memref<8x320xf32, #tpu.memory_space<vmem>>, vector<8x32xf32>,
    %c0_20 = arith.constant 0 : index
    %c32 = arith.constant 32 : index
    %36 = vector.load %arg11[%c0_20, %c32] : memref<8x320xf32, #tpu.memory_space<vmem>>, vector<8x32xf32>
    tpu.vector_store %arg11[%c0_20, %c32], %32 {strides = array<i32>} : memref<8x320xf32, #tpu.memory_space<vmem>>, vector<8x32xf32>,
    %37 = arith.addf %12, %21 : vector<8x32xf32>
    %cst_21 = arith.constant 5.000000e-01 : f32
    %38 = vector.broadcast %cst_21 : f32 to vector<8x32xf32>
    %39 = arith.mulf %38, %37 : vector<8x32xf32>
    %40 = math.tanh %39 : vector<8x32xf32>
    %cst_22 = arith.constant 5.000000e-01 : f32
    %41 = vector.broadcast %cst_22 : f32 to vector<8x32xf32>
    %42 = arith.mulf %41, %40 : vector<8x32xf32>
    %cst_23 = arith.constant 5.000000e-01 : f32
    %43 = vector.broadcast %cst_23 : f32 to vector<8x32xf32>
    %44 = arith.addf %42, %43 : vector<8x32xf32>
    %45 = arith.subf %12, %21 : vector<8x32xf32>
    %cst_24 = arith.constant 5.000000e-01 : f32
    %46 = vector.broadcast %cst_24 : f32 to vector<8x32xf32>
    %47 = arith.mulf %46, %45 : vector<8x32xf32>
    %48 = math.tanh %47 : vector<8x32xf32>
    %cst_25 = arith.constant 5.000000e-01 : f32
    %49 = vector.broadcast %cst_25 : f32 to vector<8x32xf32>
    %50 = arith.mulf %49, %48 : vector<8x32xf32>
    %cst_26 = arith.constant 5.000000e-01 : f32
    %51 = vector.broadcast %cst_26 : f32 to vector<8x32xf32>
    %52 = arith.addf %50, %51 : vector<8x32xf32>
    %53 = arith.addf %23, %32 : vector<8x32xf32>
    %cst_27 = arith.constant 5.000000e-01 : f32
    %54 = vector.broadcast %cst_27 : f32 to vector<8x32xf32>
    %55 = arith.mulf %54, %53 : vector<8x32xf32>
    %56 = math.tanh %55 : vector<8x32xf32>
    %cst_28 = arith.constant 5.000000e-01 : f32
    %57 = vector.broadcast %cst_28 : f32 to vector<8x32xf32>
    %58 = arith.mulf %57, %56 : vector<8x32xf32>
    %cst_29 = arith.constant 5.000000e-01 : f32
    %59 = vector.broadcast %cst_29 : f32 to vector<8x32xf32>
    %60 = arith.addf %58, %59 : vector<8x32xf32>
    %61 = arith.subf %23, %32 : vector<8x32xf32>
    %cst_30 = arith.constant 5.000000e-01 : f32
    %62 = vector.broadcast %cst_30 : f32 to vector<8x32xf32>
    %63 = arith.mulf %62, %61 : vector<8x32xf32>
    %64 = math.tanh %63 : vector<8x32xf32>
    %cst_31 = arith.constant 5.000000e-01 : f32
    %65 = vector.broadcast %cst_31 : f32 to vector<8x32xf32>
    %66 = arith.mulf %65, %64 : vector<8x32xf32>
    %cst_32 = arith.constant 5.000000e-01 : f32
    %67 = vector.broadcast %cst_32 : f32 to vector<8x32xf32>
    %68 = arith.addf %66, %67 : vector<8x32xf32>
    %c0_33 = arith.constant 0 : index
    %c128 = arith.constant 128 : index
    %69 = vector.load %arg11[%c0_33, %c128] : memref<8x320xf32, #tpu.memory_space<vmem>>, vector<8x32xf32>
    tpu.vector_store %arg11[%c0_33, %c128], %52 {strides = array<i32>} : memref<8x320xf32, #tpu.memory_space<vmem>>, vector<8x32xf32>,
    %c0_34 = arith.constant 0 : index
    %c160 = arith.constant 160 : index
    %70 = vector.load %arg11[%c0_34, %c160] : memref<8x320xf32, #tpu.memory_space<vmem>>, vector<8x32xf32>
    tpu.vector_store %arg11[%c0_34, %c160], %44 {strides = array<i32>} : memref<8x320xf32, #tpu.memory_space<vmem>>, vector<8x32xf32>,
    %c0_35 = arith.constant 0 : index
    %c192 = arith.constant 192 : index
    %71 = vector.load %arg11[%c0_35, %c192] : memref<8x320xf32, #tpu.memory_space<vmem>>, vector<8x32xf32>
    tpu.vector_store %arg11[%c0_35, %c192], %68 {strides = array<i32>} : memref<8x320xf32, #tpu.memory_space<vmem>>, vector<8x32xf32>,
    %c0_36 = arith.constant 0 : index
    %c224 = arith.constant 224 : index
    %72 = vector.load %arg11[%c0_36, %c224] : memref<8x320xf32, #tpu.memory_space<vmem>>, vector<8x32xf32>
    tpu.vector_store %arg11[%c0_36, %c224], %60 {strides = array<i32>} : memref<8x320xf32, #tpu.memory_space<vmem>>, vector<8x32xf32>,
    %73 = arith.minimumf %44, %60 : vector<8x32xf32>
    %74 = arith.maximumf %52, %68 : vector<8x32xf32>
    %75 = arith.subf %73, %74 : vector<8x32xf32>
    %cst_37 = arith.constant 0.000000e+00 : f32
    %76 = vector.broadcast %cst_37 : f32 to vector<8x32xf32>
    %77 = arith.maximumf %75, %76 : vector<8x32xf32>
    %78 = math.absf %75 : vector<8x32xf32>
    %cst_38 = arith.constant 0.000000e+00 : f32
    %79 = vector.broadcast %cst_38 : f32 to vector<8x32xf32>
    %80 = arith.subf %79, %78 : vector<8x32xf32>
    %81 = math.exp %80 : vector<8x32xf32>
    %82 = math.log1p %81 : vector<8x32xf32>
    %83 = arith.addf %77, %82 : vector<8x32xf32>
    %84 = arith.mulf %0, %83 : vector<8x32xf32>
    %85 = math.tanh %84 : vector<8x32xf32>
    %c0_39 = arith.constant 0 : index
    %c0_40 = arith.constant 0 : index
    %86 = vector.load %arg7[%c0_39, %c0_40] : memref<32x32xf32, #tpu.memory_space<vmem>>, vector<32x32xf32>
    %cst_41 = arith.constant dense<0.000000e+00> : vector<8x32xf32>
    %87 = tpu.matmul %85, %86, %cst_41 {dimension_numbers = #tpu.dot_dimension_numbers<[1], [0], [0], [1], [0, 0, 1, 1], [], []>} : vector<8x32xf32>, vector<32x32xf32>, vector<8x32xf32> -> vector<8x32xf32>
    %c0_42 = arith.constant 0 : index
    %c0_43 = arith.constant 0 : index
    %88 = vector.load %arg8[%c0_42, %c0_43] : memref<1x32xf32, #tpu.memory_space<vmem>>, vector<1x32xf32>
    %89 = vector.broadcast %88 : vector<1x32xf32> to vector<8x32xf32>
    %90 = arith.addf %87, %89 : vector<8x32xf32>
    %c0_44 = arith.constant 0 : index
    %c96 = arith.constant 96 : index
    %91 = vector.load %arg11[%c0_44, %c96] : memref<8x320xf32, #tpu.memory_space<vmem>>, vector<8x32xf32>
    tpu.vector_store %arg11[%c0_44, %c96], %90 {strides = array<i32>} : memref<8x320xf32, #tpu.memory_space<vmem>>, vector<8x32xf32>,
    %92 = arith.mulf %90, %83 : vector<8x32xf32>
    %c0_45 = arith.constant 0 : index
    %c0_46 = arith.constant 0 : index
    %93 = vector.load %arg9[%c0_45, %c0_46] : memref<8x32xf32, #tpu.memory_space<vmem>>, vector<8x32xf32>
    %94 = arith.addf %93, %22 : vector<8x32xf32>
    %cst_47 = arith.constant 2.000000e+00 : f32
    %95 = vector.broadcast %cst_47 : f32 to vector<8x32xf32>
    %96 = arith.mulf %94, %95 : vector<8x32xf32>
    %cst_48 = arith.constant 5.000000e-01 : f32
    %97 = vector.broadcast %cst_48 : f32 to vector<8x32xf32>
    %98 = arith.mulf %97, %96 : vector<8x32xf32>
    %99 = math.tanh %98 : vector<8x32xf32>
    %cst_49 = arith.constant 5.000000e-01 : f32
    %100 = vector.broadcast %cst_49 : f32 to vector<8x32xf32>
    %101 = arith.mulf %100, %99 : vector<8x32xf32>
    %cst_50 = arith.constant 5.000000e-01 : f32
    %102 = vector.broadcast %cst_50 : f32 to vector<8x32xf32>
    %103 = arith.addf %101, %102 : vector<8x32xf32>
    %c0_51 = arith.constant 0 : index
    %c64 = arith.constant 64 : index
    %104 = vector.load %arg11[%c0_51, %c64] : memref<8x320xf32, #tpu.memory_space<vmem>>, vector<8x32xf32>
    tpu.vector_store %arg11[%c0_51, %c64], %103 {strides = array<i32>} : memref<8x320xf32, #tpu.memory_space<vmem>>, vector<8x32xf32>,
    %105 = arith.mulf %92, %103 : vector<8x32xf32>
    %cst_52 = arith.constant dense<0.000000e+00> : vector<8xf32>
    %106 = vector.multi_reduction <add>, %105, %cst_52 [1] : vector<8x32xf32> to vector<8xf32>
    %107 = vector.shape_cast %106 : vector<8xf32> to vector<8x1xf32>
    %c0_53 = arith.constant 0 : index
    %c0_54 = arith.constant 0 : index
    %108 = vector.load %arg10[%c0_53, %c0_54] : memref<8x1xf32, #tpu.memory_space<vmem>>, vector<8x1xf32>
    tpu.vector_store %arg10[%c0_53, %c0_54], %107 {strides = array<i32>} : memref<8x1xf32, #tpu.memory_space<vmem>>, vector<8x1xf32>,
    return
  }
  func.func @transform_0(%arg0: i32) -> (i32, i32) {
    %c0_i32 = arith.constant 0 : i32
    %c0_i32_0 = arith.constant 0 : i32
    return %arg0, %c0_i32 : i32, i32
  }
  func.func @transform_1(%arg0: i32) -> (i32, i32) {
    %c0_i32 = arith.constant 0 : i32
    %c0_i32_0 = arith.constant 0 : i32
    return %arg0, %c0_i32 : i32, i32
  }
  func.func @transform_2(%arg0: i32) -> (i32, i32) {
    %c0_i32 = arith.constant 0 : i32
    %c0_i32_0 = arith.constant 0 : i32
    %c0_i32_1 = arith.constant 0 : i32
    return %c0_i32, %c0_i32_0 : i32, i32
  }
  func.func @transform_3(%arg0: i32) -> (i32, i32) {
    %c0_i32 = arith.constant 0 : i32
    %c0_i32_0 = arith.constant 0 : i32
    %c0_i32_1 = arith.constant 0 : i32
    return %c0_i32, %c0_i32_0 : i32, i32
  }
  func.func @transform_4(%arg0: i32) -> (i32, i32) {
    %c0_i32 = arith.constant 0 : i32
    %c0_i32_0 = arith.constant 0 : i32
    %c0_i32_1 = arith.constant 0 : i32
    return %c0_i32, %c0_i32_0 : i32, i32
  }
  func.func @transform_5(%arg0: i32) -> (i32, i32) {
    %c0_i32 = arith.constant 0 : i32
    %c0_i32_0 = arith.constant 0 : i32
    %c0_i32_1 = arith.constant 0 : i32
    return %c0_i32, %c0_i32_0 : i32, i32
  }
  func.func @transform_6(%arg0: i32) -> (i32, i32) {
    %c0_i32 = arith.constant 0 : i32
    %c0_i32_0 = arith.constant 0 : i32
    %c0_i32_1 = arith.constant 0 : i32
    return %c0_i32, %c0_i32_0 : i32, i32
  }
  func.func @transform_7(%arg0: i32) -> (i32, i32) {
    %c0_i32 = arith.constant 0 : i32
    %c0_i32_0 = arith.constant 0 : i32
    %c0_i32_1 = arith.constant 0 : i32
    return %c0_i32, %c0_i32_0 : i32, i32
  }
  func.func @transform_8(%arg0: i32) -> (i32, i32) {
    %c0_i32 = arith.constant 0 : i32
    %c0_i32_0 = arith.constant 0 : i32
    return %arg0, %c0_i32 : i32, i32
  }
  func.func @transform_9(%arg0: i32) -> (i32, i32) {
    %c0_i32 = arith.constant 0 : i32
    %c0_i32_0 = arith.constant 0 : i32
    return %arg0, %c0_i32 : i32, i32
  }
  func.func @transform_10(%arg0: i32) -> (i32, i32) {
    %c0_i32 = arith.constant 0 : i32
    %c0_i32_0 = arith.constant 0 : i32
    return %arg0, %c0_i32 : i32, i32
  }
}

</mosaic_0001>

<llo_original>
// kernel: tpu_custom_call.1
$region0: #{tpu_custom_call.1}
  #allocation0 [shape = 'u32[]', space=smem, size = 0x4, offset = 0x4, fixed_abs, tag = 'smem constant byte address 0x4 - core index']
  #allocation1 [shape = 'u32[144,128]{1,0:T(1,128)}', space=vmem, size = 0x12000, scoped, tag = 'internal scratch']
  %s0 = inlined_call_operand.hbm [shape: f32[8,32], index: 0, kind: input, shape index: {}]
  %s1 = inlined_call_operand.hbm [shape: f32[8,32], index: 1, kind: input, shape index: {}]
  %s2 = inlined_call_operand.hbm [shape: f32[32,96], index: 2, kind: input, shape index: {}]
  %s3 = inlined_call_operand.vmem [shape: f32[1,96], index: 3, kind: input, shape index: {}]
  %s4 = inlined_call_operand.hbm [shape: f32[32,64], index: 4, kind: input, shape index: {}]
  %s5 = inlined_call_operand.vmem [shape: f32[1,64], index: 5, kind: input, shape index: {}]
  %s6 = inlined_call_operand.hbm [shape: f32[32,32], index: 6, kind: input, shape index: {}]
  %s7 = inlined_call_operand.vmem [shape: f32[1,32], index: 7, kind: input, shape index: {}]
  %s8 = inlined_call_operand.vmem [shape: f32[8,32], index: 8, kind: input, shape index: {}]
  %s9 = inlined_call_operand.vmem [shape: f32[8,1], index: 9, kind: output, shape index: {0}]
  %s10 = inlined_call_operand.hbm [shape: f32[8,320], index: 10, kind: output, shape index: {1}]
  %11 = xla_tuple %s9, %s10
  %s12 = sld [smem:[#allocation0]]
  $region74: #{tpu_custom_call.1} parent=0
    _
  %s14 = ssub.s32 1, %s12
  %s15 = scalar_select 0, %s14, %s12
  $region1: #{tpu_custom_call.1} parent=0
    #allocation2 [shape = 'u8[4096]{0}', space=vmem, size = 0x1000, scoped, tag = 'input window, operand 0, single buffered']
    #allocation3 [shape = 's32[1]{0}', space=sflag, size = 0x4, scoped, tag = 'scoped memory for tpu_custom_call.1']
    #allocation4 [shape = 's32[1]{0}', space=sflag, size = 0x4, scoped, tag = 'scoped memory for tpu_custom_call.1']
    #allocation5 [shape = 'u8[4096]{0}', space=vmem, size = 0x1000, scoped, tag = 'input window, operand 1, single buffered']
    #allocation6 [shape = 's32[1]{0}', space=sflag, size = 0x4, scoped, tag = 'scoped memory for tpu_custom_call.1']
    #allocation7 [shape = 'u8[16384]{0}', space=vmem, size = 0x4000, scoped, tag = 'input window, operand 2, single buffered']
    #allocation8 [shape = 'u8[16384]{0}', space=vmem, size = 0x4000, scoped, tag = 'input window, operand 4, single buffered']
    #allocation9 [shape = 's32[1]{0}', space=sflag, size = 0x4, scoped, tag = 'scoped memory for tpu_custom_call.1']
    #allocation10 [shape = 'u8[16384]{0}', space=vmem, size = 0x4000, scoped, tag = 'input window, operand 6, single buffered']
    #allocation11 [shape = 'u8[12288]{0}', space=vmem, size = 0x3000, scoped, tag = 'output window, operand 1, single buffered']
    %16 = vsyncpa [#allocation3], 0
    %17 = vsyncpa [#allocation6], 0
    %18 = vsyncpa [#allocation9], 0
    %19 = vsyncpa [#allocation4], 0
    // Predicated region
    $region2: #{tpu_custom_call.1} parent=1 // pred_check
      _
    $region3: #{tpu_custom_call.1} parent=1 // pred_check_branch
      %21 = sbr.rel (0) target = $region5
    $region4: #{tpu_custom_call.1} parent=1 // pred_region
      %s23 = ssub.s32 128, 128
      %24 = vsyncadd [#allocation3], %s23
      %s26 = sshll.u32 [#allocation2], 4
      %s27 = int_to_ptr.vmem [resolvable:$true] %s26
      %29 = dma.hbm_to_vmem [thread:$0]  %s0, 128, %s27, [#allocation3]
    $region5: #{tpu_custom_call.1} parent=1 // pred_fallthru
      _
    // Predicated region
    $region6: #{tpu_custom_call.1} parent=1 // pred_check
      _
    $region7: #{tpu_custom_call.1} parent=1 // pred_check_branch
      %31 = sbr.rel (0) target = $region9
    $region8: #{tpu_custom_call.1} parent=1 // pred_region
      %s33 = ssub.s32 128, 128
      %34 = vsyncadd [#allocation6], %s33
      %s36 = sshll.u32 [#allocation5], 4
      %s37 = int_to_ptr.vmem [resolvable:$true] %s36
      %39 = dma.hbm_to_vmem [thread:$0]  %s1, 128, %s37, [#allocation6]
    $region9: #{tpu_custom_call.1} parent=1 // pred_fallthru
      _
    // Predicated region
    $region10: #{tpu_custom_call.1} parent=1 // pred_check
      _
    $region11: #{tpu_custom_call.1} parent=1 // pred_check_branch
      %41 = sbr.rel (0) target = $region13
    $region12: #{tpu_custom_call.1} parent=1 // pred_region
      %s43 = ssub.s32 512, 512
      %44 = vsyncadd [#allocation6], %s43
      %s45 = sshll.u32 [#allocation7], 4
      %s46 = int_to_ptr.vmem [resolvable:$true] %s45
      %51 = dma.hbm_to_vmem [thread:$0]  %s2, 512, %s46, [#allocation6], 128, 128, 8
    $region13: #{tpu_custom_call.1} parent=1 // pred_fallthru
      _
    // Predicated region
    $region14: #{tpu_custom_call.1} parent=1 // pred_check
      _
    $region15: #{tpu_custom_call.1} parent=1 // pred_check_branch
      %53 = sbr.rel (0) target = $region17
    $region16: #{tpu_custom_call.1} parent=1 // pred_region
      _
    $region17: #{tpu_custom_call.1} parent=1 // pred_fallthru
      _
    // Predicated region
    $region18: #{tpu_custom_call.1} parent=1 // pred_check
      _
    $region19: #{tpu_custom_call.1} parent=1 // pred_check_branch
      %55 = sbr.rel (0) target = $region21
    $region20: #{tpu_custom_call.1} parent=1 // pred_region
      %s57 = ssub.s32 512, 512
      %58 = vsyncadd [#allocation9], %s57
      %s59 = sshll.u32 [#allocation8], 4
      %s60 = int_to_ptr.vmem [resolvable:$true] %s59
      %65 = dma.hbm_to_vmem [thread:$0]  %s4, 512, %s60, [#allocation9], 128, 128, 8
    $region21: #{tpu_custom_call.1} parent=1 // pred_fallthru
      _
    // Predicated region
    $region22: #{tpu_custom_call.1} parent=1 // pred_check
      _
    $region23: #{tpu_custom_call.1} parent=1 // pred_check_branch
      %67 = sbr.rel (0) target = $region25
    $region24: #{tpu_custom_call.1} parent=1 // pred_region
      _
    $region25: #{tpu_custom_call.1} parent=1 // pred_fallthru
      _
    // Predicated region
    $region26: #{tpu_custom_call.1} parent=1 // pred_check
      _
    $region27: #{tpu_custom_call.1} parent=1 // pred_check_branch
      %69 = sbr.rel (0) target = $region29
    $region28: #{tpu_custom_call.1} parent=1 // pred_region
      %s71 = ssub.s32 512, 512
      %72 = vsyncadd [#allocation9], %s71
      %s73 = sshll.u32 [#allocation10], 4
      %s74 = int_to_ptr.vmem [resolvable:$true] %s73
      %79 = dma.hbm_to_vmem [thread:$0]  %s6, 512, %s74, [#allocation9], 128, 128, 8
    $region29: #{tpu_custom_call.1} parent=1 // pred_fallthru
      _
    // Predicated region
    $region30: #{tpu_custom_call.1} parent=1 // pred_check
      _
    $region31: #{tpu_custom_call.1} parent=1 // pred_check_branch
      %81 = sbr.rel (0) target = $region33
    $region32: #{tpu_custom_call.1} parent=1 // pred_region
      _
    $region33: #{tpu_custom_call.1} parent=1 // pred_fallthru
      _
    // Predicated region
    $region34: #{tpu_custom_call.1} parent=1 // pred_check
      _
    $region35: #{tpu_custom_call.1} parent=1 // pred_check_branch
      %83 = sbr.rel (0) target = $region37
    $region36: #{tpu_custom_call.1} parent=1 // pred_region
      _
    $region37: #{tpu_custom_call.1} parent=1 // pred_fallthru
      _
    // Predicated region
    $region38: #{tpu_custom_call.1} parent=1 // pred_check
      _
    $region39: #{tpu_custom_call.1} parent=1 // pred_check_branch
      %85 = sbr.rel (0) target = $region41
    $region40: #{tpu_custom_call.1} parent=1 // pred_region
      %86 = dma.done [#allocation3], 128
    $region41: #{tpu_custom_call.1} parent=1 // pred_fallthru
      _
    // Predicated region
    $region42: #{tpu_custom_call.1} parent=1 // pred_check
      _
    $region43: #{tpu_custom_call.1} parent=1 // pred_check_branch
      %88 = sbr.rel (0) target = $region45
    $region44: #{tpu_custom_call.1} parent=1 // pred_region
      %89 = dma.done [#allocation6], 128
    $region45: #{tpu_custom_call.1} parent=1 // pred_fallthru
      _
    // Predicated region
    $region46: #{tpu_custom_call.1} parent=1 // pred_check
      _
    $region47: #{tpu_custom_call.1} parent=1 // pred_check_branch
      %91 = sbr.rel (0) target = $region49
    $region48: #{tpu_custom_call.1} parent=1 // pred_region
      %92 = dma.done [#allocation6], 512
    $region49: #{tpu_custom_call.1} parent=1 // pred_fallthru
      _
    // Predicated region
    $region50: #{tpu_custom_call.1} parent=1 // pred_check
      _
    $region51: #{tpu_custom_call.1} parent=1 // pred_check_branch
      %94 = sbr.rel (0) target = $region53
    $region52: #{tpu_custom_call.1} parent=1 // pred_region
      %95 = dma.done [#allocation9], 512
    $region53: #{tpu_custom_call.1} parent=1 // pred_fallthru
      _
    // Predicated region
    $region54: #{tpu_custom_call.1} parent=1 // pred_check
      _
    $region55: #{tpu_custom_call.1} parent=1 // pred_check_branch
      %97 = sbr.rel (0) target = $region57
    $region56: #{tpu_custom_call.1} parent=1 // pred_region
      %98 = dma.done [#allocation9], 512
    $region57: #{tpu_custom_call.1} parent=1 // pred_fallthru
      _
    %v99 = vld [vmem:[#allocation2] sm:$0xff]
    %v100 = vld [vmem:[#allocation5] sm:$0xff]
    %v101 = vld [vmem:[#allocation7] sm:$0xff]
    %v102 = vld [vmem:[#allocation7 + $0x8] sm:$0xff]
    %v103 = vld [vmem:[#allocation7 + $0x10] sm:$0xff]
    %v104 = vld [vmem:[#allocation7 + $0x18] sm:$0xff]
    %v105 = vld [vmem:[%s3] sm:$0x1]
    %v107 = vlaneseq
    %v108 = vshrl.u32 %v107, 7
    %v109 = vsub.s32 0, %v108
    %v110 = vrot.slane %v105, %v109
    %vm112 = vcmask 261120
    %v114 = vsel %vm112, %v99, 0
    %116 = vmatprep.subr.mxu0 0.0
    %117 = vmatpush1.msra.mxu0 %v101
    %118 = vmatprep.subr.mxu0 0.0
    %119 = vmatpush1.msra.mxu0 %v102
    %120 = vmatprep.subr.mxu0 0.0
    %121 = vmatpush1.msra.mxu0 %v103
    %122 = vmatprep.subr.mxu0 0.0
    %123 = vmatpush1.msra.mxu0 %v104
    %124 = vmatprep.subr.mxu0 0.0
    %125 = vmatpush1.msra.mxu0 0.0
    %126 = vmatprep.subr.mxu0 0.0
    %127 = vmatpush1.msra.mxu0 0.0
    %128 = vmatprep.subr.mxu0 0.0
    %129 = vmatpush1.msra.mxu0 0.0
    %130 = vmatprep.subr.mxu0 0.0
    %131 = vmatpush1.msra.mxu0 0.0
    %132 = vmatprep.subr.mxu0 0.0
    %133 = vmatpush1.msra.mxu0 0.0
    %134 = vmatprep.subr.mxu0 0.0
    %135 = vmatpush1.msra.mxu0 0.0
    %136 = vmatprep.subr.mxu0 0.0
    %137 = vmatpush1.msra.mxu0 0.0
    %138 = vmatprep.subr.mxu0 0.0
    %139 = vmatpush1.msra.mxu0 0.0
    %140 = vmatprep.subr.mxu0 0.0
    %141 = vmatpush1.msra.mxu0 0.0
    %142 = vmatprep.subr.mxu0 0.0
    %143 = vmatpush1.msra.mxu0 0.0
    %144 = vmatprep.subr.mxu0 0.0
    %145 = vmatpush1.msra.mxu0 0.0
    %146 = vmatprep.subr.mxu0 0.0
    %147 = vmatpush1.msra.mxu0 0.0
    %148 = vmatprep.subr.mxu0 0.0
    %149 = vmatpush1.msra.mxu0 0.0
    %150 = vmatprep.subr.mxu0 0.0
    %151 = vmatpush1.msra.mxu0 0.0
    %152 = vmatprep.subr.mxu0 0.0
    %153 = vmatpush1.msra.mxu0 0.0
    %154 = vmatprep.subr.mxu0 0.0
    %155 = vmatpush1.msra.mxu0 0.0
    %156 = vmatprep.subr.mxu0 0.0
    %157 = vmatpush1.msra.mxu0 0.0
    %158 = vmatprep.subr.mxu0 0.0
    %159 = vmatpush1.msra.mxu0 0.0
    %160 = vmatprep.subr.mxu0 0.0
    %161 = vmatpush1.msra.mxu0 0.0
    %162 = vmatprep.subr.mxu0 0.0
    %163 = vmatpush1.msra.mxu0 0.0
    %164 = vmatprep.subr.mxu0 0.0
    %165 = vmatpush1.msra.mxu0 0.0
    %166 = vmatprep.subr.mxu0 0.0
    %167 = vmatpush1.msra.mxu0 0.0
    %168 = vmatprep.subr.mxu0 0.0
    %169 = vmatpush1.msra.mxu0 0.0
    %170 = vmatprep.subr.mxu0 0.0
    %171 = vmatpush1.msra.mxu0 0.0
    %172 = vmatprep.subr.mxu0 0.0
    %173 = vmatpush1.msra.mxu0 0.0
    %174 = vmatprep.subr.mxu0 0.0
    %175 = vmatpush1.msra.mxu0 0.0
    %176 = vmatprep.subr.mxu0 0.0
    %177 = vmatpush1.msra.mxu0 0.0
    %178 = vmatprep.subr.mxu0 0.0
    %179 = vmatpush1.msra.mxu0 0.0
    %180 = vmatprep.mubr.f32.mxu0 0.0
    %181 = vmatmul.mubr.f32.gmra.mrb[0].mxu0 %v114
    %v182 = vpop.f32.mrb[0].mxu0
    %v183 = vadd.f32 %v110, %v182
    %v184 = vpop.f32.mrb[0].mxu0
    %185 = vdwg.mxu0
    %v186 = vld [vmem:[#allocation8] sm:$0xff]
    %v187 = vld [vmem:[#allocation8 + $0x8] sm:$0xff]
    %v188 = vld [vmem:[#allocation8 + $0x10] sm:$0xff]
    %v189 = vld [vmem:[#allocation8 + $0x18] sm:$0xff]
    %v190 = vld [vmem:[%s5] sm:$0x1]
    %v192 = vlaneseq
    %v193 = vshrl.u32 %v192, 7
    %v194 = vsub.s32 0, %v193
    %v195 = vrot.slane %v190, %v194
    %v198 = vsel %vm112, %v100, 0
    %200 = vmatprep.subr.mxu0 0.0
    %201 = vmatpush1.msra.mxu0 %v186
    %202 = vmatprep.subr.mxu0 0.0
    %203 = vmatpush1.msra.mxu0 %v187
    %204 = vmatprep.subr.mxu0 0.0
    %205 = vmatpush1.msra.mxu0 %v188
    %206 = vmatprep.subr.mxu0 0.0
    %207 = vmatpush1.msra.mxu0 %v189
    %208 = vmatprep.subr.mxu0 0.0
    %209 = vmatpush1.msra.mxu0 0.0
    %210 = vmatprep.subr.mxu0 0.0
    %211 = vmatpush1.msra.mxu0 0.0
    %212 = vmatprep.subr.mxu0 0.0
    %213 = vmatpush1.msra.mxu0 0.0
    %214 = vmatprep.subr.mxu0 0.0
    %215 = vmatpush1.msra.mxu0 0.0
    %216 = vmatprep.subr.mxu0 0.0
    %217 = vmatpush1.msra.mxu0 0.0
    %218 = vmatprep.subr.mxu0 0.0
    %219 = vmatpush1.msra.mxu0 0.0
    %220 = vmatprep.subr.mxu0 0.0
    %221 = vmatpush1.msra.mxu0 0.0
    %222 = vmatprep.subr.mxu0 0.0
    %223 = vmatpush1.msra.mxu0 0.0
    %224 = vmatprep.subr.mxu0 0.0
    %225 = vmatpush1.msra.mxu0 0.0
    %226 = vmatprep.subr.mxu0 0.0
    %227 = vmatpush1.msra.mxu0 0.0
    %228 = vmatprep.subr.mxu0 0.0
    %229 = vmatpush1.msra.mxu0 0.0
    %230 = vmatprep.subr.mxu0 0.0
    %231 = vmatpush1.msra.mxu0 0.0
    %232 = vmatprep.subr.mxu0 0.0
    %233 = vmatpush1.msra.mxu0 0.0
    %234 = vmatprep.subr.mxu0 0.0
    %235 = vmatpush1.msra.mxu0 0.0
    %236 = vmatprep.subr.mxu0 0.0
    %237 = vmatpush1.msra.mxu0 0.0
    %238 = vmatprep.subr.mxu0 0.0
    %239 = vmatpush1.msra.mxu0 0.0
    %240 = vmatprep.subr.mxu0 0.0
    %241 = vmatpush1.msra.mxu0 0.0
    %242 = vmatprep.subr.mxu0 0.0
    %243 = vmatpush1.msra.mxu0 0.0
    %244 = vmatprep.subr.mxu0 0.0
    %245 = vmatpush1.msra.mxu0 0.0
    %246 = vmatprep.subr.mxu0 0.0
    %247 = vmatpush1.msra.mxu0 0.0
    %248 = vmatprep.subr.mxu0 0.0
    %249 = vmatpush1.msra.mxu0 0.0
    %250 = vmatprep.subr.mxu0 0.0
    %251 = vmatpush1.msra.mxu0 0.0
    %252 = vmatprep.subr.mxu0 0.0
    %253 = vmatpush1.msra.mxu0 0.0
    %254 = vmatprep.subr.mxu0 0.0
    %255 = vmatpush1.msra.mxu0 0.0
    %256 = vmatprep.subr.mxu0 0.0
    %257 = vmatpush1.msra.mxu0 0.0
    %258 = vmatprep.subr.mxu0 0.0
    %259 = vmatpush1.msra.mxu0 0.0
    %260 = vmatprep.subr.mxu0 0.0
    %261 = vmatpush1.msra.mxu0 0.0
    %262 = vmatprep.subr.mxu0 0.0
    %263 = vmatpush1.msra.mxu0 0.0
    %264 = vmatprep.mubr.f32.mxu0 0.0
    %265 = vmatmul.mubr.f32.gmra.mrb[0].mxu0 %v198
    %v266 = vpop.f32.mrb[0].mxu0
    %v267 = vadd.f32 %v195, %v266
    %v268 = vpop.f32.mrb[0].mxu0
    %269 = vdwg.mxu0
    %v270 = vmax.f32 %v183, 0.0
    %v271 = vand.u32 2147483647, %v183
    %v272 = vsub.f32 0.0, %v271
    %v273 = vmul.f32 %v272, 1.442695
    %v274 = vpow.pop %v273
    %v275 = vadd.f32 %v274, 1.0
    %v276 = vlog2.pop %v275
    %v277 = vmul.f32 %v276, 0.6931472
    %v278 = vmul.f32 -0.5, %v274
    %v279 = vadd.f32 %v278, 1.0
    %v280 = vmul.f32 %v279, %v274
    %v281 = vand.u32 2147483647, %v274
    %vm282 = vcmp.lt.f32.partialorder %v281, 0.0004427343
    %v283 = vsel %vm282, %v280, %v277
    %v284 = vadd.f32 %v270, %v283
    %v285 = vmax.f32 %v267, 0.0
    %v286 = vand.u32 2147483647, %v267
    %v287 = vsub.f32 0.0, %v286
    %v288 = vmul.f32 %v287, 1.442695
    %v289 = vpow.pop %v288
    %v290 = vadd.f32 %v289, 1.0
    %v291 = vlog2.pop %v290
    %v292 = vmul.f32 %v291, 0.6931472
    %v293 = vmul.f32 -0.5, %v289
    %v294 = vadd.f32 %v293, 1.0
    %v295 = vmul.f32 %v294, %v289
    %v296 = vand.u32 2147483647, %v289
    %vm297 = vcmp.lt.f32.partialorder %v296, 0.0004427343
    %v298 = vsel %vm297, %v295, %v292
    %v299 = vadd.f32 %v285, %v298
    %300 = vst.msk [vmem:[#allocation11 + $0x10] sm:$0xff] %vm112, %v183
    %302 = vrot.lane.b32.xlu0 %v267, 32
    %v303 = vpop.permute.xlu0 %302
    %vm305 = vcmask 523520
    %306 = vst.msk [vmem:[#allocation11 + $0x10] sm:$0xff] %vm305, %v303
    %308 = vrot.lane.b32.xlu0 %v284, 96
    %v309 = vpop.permute.xlu0 %308
    %311 = vst.msk [vmem:[#allocation11] sm:$0xff] %vm112, %v309
    %312 = vst.msk [vmem:[#allocation11] sm:$0xff] %vm305, %v299
    %v313 = vadd.f32 %v183, %v309
    %v314 = vmul.f32 %v313, 0.5
    %v315 = vtanh.pop %v314
    %v316 = vmul.f32 %v315, 0.5
    %v317 = vadd.f32 %v316, 0.5
    %v318 = vsub.f32 %v183, %v309
    %v319 = vmul.f32 %v318, 0.5
    %v320 = vtanh.pop %v319
    %v321 = vmul.f32 %v320, 0.5
    %v322 = vadd.f32 %v321, 0.5
    %324 = vrot.lane.b32.xlu0 %v299, 96
    %v325 = vpop.permute.xlu0 %324
    %v327 = vadd.f32 %v267, %v325
    %v328 = vmul.f32 %v327, 0.5
    %v329 = vtanh.pop %v328
    %v330 = vmul.f32 %v329, 0.5
    %v331 = vadd.f32 %v330, 0.5
    %v332 = vsub.f32 %v267, %v325
    %v333 = vmul.f32 %v332, 0.5
    %v334 = vtanh.pop %v333
    %v335 = vmul.f32 %v334, 0.5
    %v336 = vadd.f32 %v335, 0.5
    %337 = vst.msk [vmem:[#allocation11 + $0x8] sm:$0xff] %vm112, %v322
    %339 = vrot.lane.b32.xlu0 %v317, 32
    %v340 = vpop.permute.xlu0 %339
    %342 = vst.msk [vmem:[#allocation11 + $0x8] sm:$0xff] %vm305, %v340
    %344 = vrot.lane.b32.xlu0 %v336, 64
    %v345 = vpop.permute.xlu0 %344
    %vm347 = vcmask 785920
    %348 = vst.msk [vmem:[#allocation11 + $0x8] sm:$0xff] %vm347, %v345
    %350 = vrot.lane.b32.xlu0 %v331, 96
    %v351 = vpop.permute.xlu0 %350
    %vm353 = vcmask 1048320
    %354 = vst.msk [vmem:[#allocation11 + $0x8] sm:$0xff] %vm353, %v351
    %v355 = vmin.f32 %v317, %v331
    %v356 = vmax.f32 %v322, %v336
    %v357 = vsub.f32 %v355, %v356
    %v358 = vmax.f32 %v357, 0.0
    %v359 = vand.u32 2147483647, %v357
    %v360 = vsub.f32 0.0, %v359
    %v361 = vmul.f32 %v360, 1.442695
    %v362 = vpow.pop %v361
    %v363 = vadd.f32 %v362, 1.0
    %v364 = vlog2.pop %v363
    %v365 = vmul.f32 %v364, 0.6931472
    %v366 = vmul.f32 -0.5, %v362
    %v367 = vadd.f32 %v366, 1.0
    %v368 = vmul.f32 %v367, %v362
    %v369 = vand.u32 2147483647, %v362
    %vm370 = vcmp.lt.f32.partialorder %v369, 0.0004427343
    %v371 = vsel %vm370, %v368, %v365
    %v372 = vadd.f32 %v358, %v371
    %v373 = vmul.f32 %v99, %v372
    %v374 = vtanh.pop %v373
    %v375 = vld [vmem:[#allocation10] sm:$0xff]
    %v376 = vld [vmem:[#allocation10 + $0x8] sm:$0xff]
    %v377 = vld [vmem:[#allocation10 + $0x10] sm:$0xff]
    %v378 = vld [vmem:[#allocation10 + $0x18] sm:$0xff]
    %v379 = vld [vmem:[%s7] sm:$0x1]
    %v381 = vlaneseq
    %v382 = vshrl.u32 %v381, 7
    %v383 = vsub.s32 0, %v382
    %v384 = vrot.slane %v379, %v383
    %v387 = vsel %vm112, %v374, 0
    %389 = vmatprep.subr.mxu0 0.0
    %390 = vmatpush1.msra.mxu0 %v375
    %391 = vmatprep.subr.mxu0 0.0
    %392 = vmatpush1.msra.mxu0 %v376
    %393 = vmatprep.subr.mxu0 0.0
    %394 = vmatpush1.msra.mxu0 %v377
    %395 = vmatprep.subr.mxu0 0.0
    %396 = vmatpush1.msra.mxu0 %v378
    %397 = vmatprep.subr.mxu0 0.0
    %398 = vmatpush1.msra.mxu0 0.0
    %399 = vmatprep.subr.mxu0 0.0
    %400 = vmatpush1.msra.mxu0 0.0
    %401 = vmatprep.subr.mxu0 0.0
    %402 = vmatpush1.msra.mxu0 0.0
    %403 = vmatprep.subr.mxu0 0.0
    %404 = vmatpush1.msra.mxu0 0.0
    %405 = vmatprep.subr.mxu0 0.0
    %406 = vmatpush1.msra.mxu0 0.0
    %407 = vmatprep.subr.mxu0 0.0
    %408 = vmatpush1.msra.mxu0 0.0
    %409 = vmatprep.subr.mxu0 0.0
    %410 = vmatpush1.msra.mxu0 0.0
    %411 = vmatprep.subr.mxu0 0.0
    %412 = vmatpush1.msra.mxu0 0.0
    %413 = vmatprep.subr.mxu0 0.0
    %414 = vmatpush1.msra.mxu0 0.0
    %415 = vmatprep.subr.mxu0 0.0
    %416 = vmatpush1.msra.mxu0 0.0
    %417 = vmatprep.subr.mxu0 0.0
    %418 = vmatpush1.msra.mxu0 0.0
    %419 = vmatprep.subr.mxu0 0.0
    %420 = vmatpush1.msra.mxu0 0.0
    %421 = vmatprep.subr.mxu0 0.0
    %422 = vmatpush1.msra.mxu0 0.0
    %423 = vmatprep.subr.mxu0 0.0
    %424 = vmatpush1.msra.mxu0 0.0
    %425 = vmatprep.subr.mxu0 0.0
    %426 = vmatpush1.msra.mxu0 0.0
    %427 = vmatprep.subr.mxu0 0.0
    %428 = vmatpush1.msra.mxu0 0.0
    %429 = vmatprep.subr.mxu0 0.0
    %430 = vmatpush1.msra.mxu0 0.0
    %431 = vmatprep.subr.mxu0 0.0
    %432 = vmatpush1.msra.mxu0 0.0
    %433 = vmatprep.subr.mxu0 0.0
    %434 = vmatpush1.msra.mxu0 0.0
    %435 = vmatprep.subr.mxu0 0.0
    %436 = vmatpush1.msra.mxu0 0.0
    %437 = vmatprep.subr.mxu0 0.0
    %438 = vmatpush1.msra.mxu0 0.0
    %439 = vmatprep.subr.mxu0 0.0
    %440 = vmatpush1.msra.mxu0 0.0
    %441 = vmatprep.subr.mxu0 0.0
    %442 = vmatpush1.msra.mxu0 0.0
    %443 = vmatprep.subr.mxu0 0.0
    %444 = vmatpush1.msra.mxu0 0.0
    %445 = vmatprep.subr.mxu0 0.0
    %446 = vmatpush1.msra.mxu0 0.0
    %447 = vmatprep.subr.mxu0 0.0
    %448 = vmatpush1.msra.mxu0 0.0
    %449 = vmatprep.subr.mxu0 0.0
    %450 = vmatpush1.msra.mxu0 0.0
    %451 = vmatprep.subr.mxu0 0.0
    %452 = vmatpush1.msra.mxu0 0.0
    %453 = vmatprep.mubr.f32.mxu0 0.0
    %454 = vmatmul.mubr.f32.gmra.mrb[0].mxu0 %v387
    %v455 = vpop.f32.mrb[0].mxu0
    %v456 = vadd.f32 %v384, %v455
    %v457 = vpop.f32.mrb[0].mxu0
    %458 = vdwg.mxu0
    %460 = vrot.lane.b32.xlu0 %v456, 96
    %v461 = vpop.permute.xlu0 %460
    %463 = vst.msk [vmem:[#allocation11] sm:$0xff] %vm353, %v461
    %v464 = vmul.f32 %v456, %v372
    %v465 = vld [vmem:[%s8] sm:$0xff]
    %467 = vrot.lane.b32.xlu0 %v183, 64
    %v468 = vpop.permute.xlu0 %467
    %v470 = vadd.f32 %v465, %v468
    %v471 = vmul.f32 %v470, 2.0
    %v472 = vmul.f32 %v471, 0.5
    %v473 = vtanh.pop %v472
    %v474 = vmul.f32 %v473, 0.5
    %v475 = vadd.f32 %v474, 0.5
    %477 = vrot.lane.b32.xlu0 %v475, 64
    %v478 = vpop.permute.xlu0 %477
    %480 = vst.msk [vmem:[#allocation11] sm:$0xff] %vm347, %v478
    %v481 = vmul.f32 %v464, %v475
    %v482 = vsel %vm112, %v481, 0.0
    %483 = vadd.xlane.f32.xlu0 %v482
    %v484 = vpop.xlane.xlu0 %483
    %vm485 = vcmask 7168
    %486 = vst.msk [vmem:[%s9] sm:$0xff] %vm485, %v484
    // Predicated region
    $region58: #{tpu_custom_call.1} parent=1 // pred_check
      _
    $region59: #{tpu_custom_call.1} parent=1 // pred_check_branch
      %488 = sbr.rel (0) target = $region61
    $region60: #{tpu_custom_call.1} parent=1 // pred_region
      _
    $region61: #{tpu_custom_call.1} parent=1 // pred_fallthru
      _
    // Predicated region
    $region62: #{tpu_custom_call.1} parent=1 // pred_check
      _
    $region63: #{tpu_custom_call.1} parent=1 // pred_check_branch
      %490 = sbr.rel (0) target = $region65
    $region64: #{tpu_custom_call.1} parent=1 // pred_region
      %s492 = ssub.s32 384, 384
      %493 = vsyncadd [#allocation4], %s492
      %s495 = sshll.u32 [#allocation11], 4
      %s496 = int_to_ptr.vmem [resolvable:$true] %s495
      %498 = dma.vmem_to_hbm [thread:$0]  %s496, 384, %s10, [#allocation4]
    $region65: #{tpu_custom_call.1} parent=1 // pred_fallthru
      _
    // Predicated region
    $region66: #{tpu_custom_call.1} parent=1 // pred_check
      _
    $region67: #{tpu_custom_call.1} parent=1 // pred_check_branch
      %500 = sbr.rel (0) target = $region69
    $region68: #{tpu_custom_call.1} parent=1 // pred_region
      _
    $region69: #{tpu_custom_call.1} parent=1 // pred_fallthru
      _
    // Predicated region
    $region70: #{tpu_custom_call.1} parent=1 // pred_check
      _
    $region71: #{tpu_custom_call.1} parent=1 // pred_check_branch
      %502 = sbr.rel (0) target = $region73
    $region72: #{tpu_custom_call.1} parent=1 // pred_region
      %503 = dma.done [#allocation4], 384
    $region73: #{tpu_custom_call.1} parent=1 // pred_fallthru
      _
    %504 = vsyncpa [#allocation3], 1
    %505 = vsyncpa [#allocation6], 1
    %506 = vsyncpa [#allocation9], 1
    %507 = vsyncpa [#allocation4], 1

</llo_original>
